<compile_context>
chip_gen: v7x
topology: tpu7x:2x2x1
jax: 0.10.0
libtpu: 0.0.40
codegen_flags: <defaults>
</compile_context>

<pallas_src>
import functools

import jax
import jax.numpy as jnp
from jax.experimental import pallas as pl
from jax.experimental.pallas import tpu as pltpu


def _wsconv_kernel(x_ref, m_ref, w_ref, b_ref, o_ref, cols_ref, *,
                   H, W, K, pad, cin_pad, chunks, cache_cols):
    """One (batch-tile, cout-tile) grid step of the weight-scaled conv.

    x_ref:    (Nb, cin_pad, L)        flattened NCHW activation (lanes = H*W)
    m_ref:    (n_masks, 1, L)         validity masks for taps with dw != 0
    w_ref:    (t_cout, K*K*cin_pad)   weight with ws-scale folded in
    b_ref:    (t_cout, 1)             bias
    o_ref:    (Nb, t_cout, L)         output (NCHW order, lane-dense)
    cols_ref: (Nb, rows, L)           VMEM scratch for the im2col slab / chunk
    """
    L = H * W
    Nb = x_ref.shape[0]
    co = pl.program_id(1)

    # Static tap -> mask-row mapping. Only taps with a horizontal offset need a
    # mask (for dw == 0 the zero fill of the flat shift already zeroes the
    # out-of-range rows; the center tap needs nothing).
    mask_row = {}
    for kh in range(K):
        for kw in range(K):
            if kw != pad:
                mask_row[kh * K + kw] = len(mask_row)

    for nb in range(Nb):                                   # static unroll
        acc = None
        for (t0, n_taps) in chunks:                        # static unroll
            rows = n_taps * cin_pad
            base = t0 * cin_pad if cache_cols else 0

            def build_chunk(nb=nb, t0=t0, n_taps=n_taps, base=base):
                # Write each shifted (and, if needed, masked) tap in place.
                # TODO(synk): the static lane shift could use pltpu.roll (XLU
                # slot) instead of concat+zero-fill; kept concat + dw==0 mask
                # skip for guaranteed correctness of the wrap handling.
                xb = x_ref[nb]                             # (cin_pad, L)
                for j in range(n_taps):
                    t = t0 + j
                    kh, kw = divmod(t, K)
                    d = (kh - pad) * W + (kw - pad)        # static flat shift
                    if d > 0:
                        piece = jnp.concatenate(
                            [xb[:, d:], jnp.zeros((cin_pad, d), xb.dtype)],
                            axis=1)
                    elif d < 0:
                        piece = jnp.concatenate(
                            [jnp.zeros((cin_pad, -d), xb.dtype), xb[:, :L + d]],
                            axis=1)
                    else:
                        piece = xb
                    if t in mask_row:                      # horizontal-wrap taps
                        piece = piece * m_ref[mask_row[t]]
                    cols_ref[nb, pl.ds(base + j * cin_pad, cin_pad), :] = piece

            if cache_cols:
                # Slab is identical for every Cout tile of this batch tile:
                # build once at co == 0, reuse from the scratch afterwards.
                pl.when(co == 0)(build_chunk)
            else:
                build_chunk()

            # Accumulating MXU matmul per chunk (f32 accumulation).
            part = jnp.dot(
                w_ref[:, t0 * cin_pad:(t0 + n_taps) * cin_pad],
                cols_ref[nb, pl.ds(base, rows), :],
                preferred_element_type=jnp.float32)
            acc = part if acc is None else acc + part

        acc = acc + b_ref[...].astype(jnp.float32)         # (t_cout, 1) bcast
        o_ref[nb] = acc.astype(o_ref.dtype)


def wsconv2d(x_nchw, weight_oihw, bias, *, stride=1, padding=1, gain=2):
    """Weight-scaled conv2d: conv2d(x * scale, W, 'same') + bias."""
    # TODO(synk): only the module defaults (stride=1, 'same' padding) are
    # implemented; general stride/padding needs different output indexing.
    assert stride == 1
    N, Cin, H, W = x_nchw.shape
    Cout, Cin2, K, K2 = weight_oihw.shape
    assert Cin == Cin2 and K == K2
    assert 2 * padding == K - 1, "only 'same' convolutions are supported"
    assert H >= K and W >= K
    scale = (gain / (Cin * K * K)) ** 0.5
    L = H * W
    dt = jnp.dtype(x_nchw.dtype).itemsize

    # dtype-aware sublane padding of Cin (8 f32 / 16 bf16 / 32 int8-fp8).
    sub = max(8, 32 // dt)
    cin_pad = ((Cin + sub - 1) // sub) * sub
    kkc = K * K * cin_pad

    xf = x_nchw.reshape(N, Cin, L)                         # free reshape
    if cin_pad != Cin:
        xf = jnp.pad(xf, ((0, 0), (0, cin_pad - Cin), (0, 0)))

    # Fold the ws scale into the (tiny) weight; rows ordered (kh, kw, ci) to
    # match the in-kernel im2col row order.
    wt = jnp.transpose(weight_oihw, (0, 2, 3, 1))          # (Cout, K, K, Cin)
    if cin_pad != Cin:
        wt = jnp.pad(wt, ((0, 0), (0, 0), (0, 0), (0, cin_pad - Cin)))
    w2 = (wt * scale).reshape(Cout, kkc).astype(x_nchw.dtype)
    b2 = bias.reshape(Cout, 1).astype(jnp.float32)

    # Per-tap validity masks, only for taps with dw != 0 (horizontal wrap of
    # the flat shift). Tiny constants; XLA constant-folds this.
    oo = jnp.arange(L, dtype=jnp.int32)
    hh, ww = oo // W, oo % W
    masks = []
    for kh in range(K):
        for kw in range(K):
            if kw == padding:
                continue
            dh, dw = kh - padding, kw - padding
            masks.append((hh + dh >= 0) & (hh + dh < H) &
                         (ww + dw >= 0) & (ww + dw < W))
    if not masks:                                          # K == 1 corner case
        masks.append(jnp.ones((L,), bool))
    taps_mask = jnp.stack(masks).astype(x_nchw.dtype).reshape(len(masks), 1, L)
    n_masks = taps_mask.shape[0]

    # Cout tiling: prefer 256-row tiles (native v6e/v7x MXU), then 128.
    # TODO(synk): cdiv tiling with a masked last tile for large non-divisible Cout.
    if Cout >= 256 and Cout % 256 == 0:
        t_cout = 256
    elif Cout >= 128 and Cout % 128 == 0:
        t_cout = 128
    else:
        t_cout = Cout
    n_co = Cout // t_cout

    # Contraction chunks of whole kh rows, >=128 rows each when Cin allows, so
    # the slab build overlaps with accumulating MXU matmuls.
    kh_per_chunk = min(K, max(1, -(-128 // (K * cin_pad))))
    chunks = []
    for kh0 in range(0, K, kh_per_chunk):
        n_kh = min(kh_per_chunk, K - kh0)
        chunks.append((kh0 * K, n_kh * K))
    chunks = tuple(chunks)
    chunk_rows_max = max(nt for _, nt in chunks) * cin_pad

    # Batch blocking: aim for an x block of ~1 MiB per grid step.
    per_batch_x = cin_pad * L * dt
    nb_cap = max(1, min(N, 8, -(-(1 << 20) // per_batch_x)))
    Nb = 1
    for cand in range(nb_cap, 0, -1):
        if N % cand == 0:
            Nb = cand
            break

    # Generation-aware VMEM budget (v7x has 64 MiB / TC, v5e/v6e 128 MiB).
    try:
        phys_vmem = int(pltpu.get_tpu_info().vmem_capacity_bytes)
    except Exception:
        phys_vmem = 64 << 20
    vmem_cap = max(32 << 20, (phys_vmem * 3) // 4)

    def vmem_need(nb, scratch_rows):
        blocks = (2 * nb * cin_pad * L * dt                # x (double buffered)
                  + 2 * n_masks * L * dt                   # masks
                  + 2 * t_cout * kkc * dt                  # weight
                  + 2 * t_cout * 4                         # bias
                  + 2 * nb * t_cout * L * dt)              # out
        scratch = nb * scratch_rows * L * dt               # im2col scratch
        work = 3 * t_cout * L * 4 + chunk_rows_max * L * dt
        return int(1.3 * (blocks + scratch + work)) + (2 << 20)

    # Cache the full slab across Cout tiles when it is cheap to hold resident.
    cache_cols = (n_co > 1) and (Nb * kkc * L * dt <= (12 << 20))
    scratch_rows = kkc if cache_cols else chunk_rows_max
    need = vmem_need(Nb, scratch_rows)
    if need > vmem_cap:                                    # shed optional extras
        cache_cols, Nb = False, 1
        scratch_rows = chunk_rows_max
        need = vmem_need(Nb, scratch_rows)
    # TODO(synk): spatial-row (halo) tiling + Cin-reduction grid axis once a
    # single chunk no longer fits the per-TC VMEM budget (very large Cin*H*W).
    vmem_limit = int(min(vmem_cap, max(32 << 20, need)))

    kernel = functools.partial(
        _wsconv_kernel, H=H, W=W, K=K, pad=padding, cin_pad=cin_pad,
        chunks=chunks, cache_cols=cache_cols)

    out_flat = pl.pallas_call(
        kernel,
        out_shape=jax.ShapeDtypeStruct((N, Cout, L), x_nchw.dtype),
        grid_spec=pltpu.PrefetchScalarGridSpec(
            num_scalar_prefetch=0,
            grid=(N // Nb, n_co),
            in_specs=[
                pl.BlockSpec((Nb, cin_pad, L), lambda n, co: (n, 0, 0)),
                pl.BlockSpec((n_masks, 1, L), lambda n, co: (0, 0, 0)),
                pl.BlockSpec((t_cout, kkc), lambda n, co: (co, 0)),
                pl.BlockSpec((t_cout, 1), lambda n, co: (co, 0)),
            ],
            out_specs=pl.BlockSpec((Nb, t_cout, L), lambda n, co: (n, co, 0)),
            scratch_shapes=[pltpu.VMEM((Nb, scratch_rows, L), x_nchw.dtype)],
        ),
        compiler_params=pltpu.CompilerParams(
            dimension_semantics=("parallel", "arbitrary"),
            vmem_limit_bytes=vmem_limit),
    )(xf, taps_mask, w2, b2)
    return out_flat.reshape(N, Cout, H, W)                 # free reshape


if __name__ == "__main__":
    # Deterministic parameter init matching the module's __init__:
    #   conv.weight ~ N(0, 1) (nn.init.normal_), bias = 0 (nn.init.zeros_).
    key = jax.random.PRNGKey(0)

    def check(N, Cin, Cout, H, W, K=3, pad=1):
        kx, kw = jax.random.split(jax.random.fold_in(key, Cout))
        x = jax.random.normal(kx, (N, Cin, H, W), jnp.float32)
        weight = jax.random.normal(kw, (Cout, Cin, K, K), jnp.float32)
        bias = jnp.zeros((Cout,), jnp.float32)

        out = jax.block_until_ready(wsconv2d(x, weight, bias, padding=pad))

        # Pure-JAX reference.
        scale = (2 / (Cin * K * K)) ** 0.5
        ref = jax.lax.conv_general_dilated(
            x * scale, weight, (1, 1), ((pad, pad), (pad, pad)),
            dimension_numbers=("NCHW", "OIHW", "NCHW"))
        ref = ref + bias.reshape(1, Cout, 1, 1)

        assert out.shape == ref.shape == (N, Cout, H, W)
        err = float(jnp.max(jnp.abs(out - ref)))
        assert err < 2e-3, f"max abs err {err}"

    # Module-default shapes (single Cout tile, no slab cache, Nb=2 batch block).
    check(2, 4, 8, 16, 16)
    # Multi Cout-tile path (t_cout=128, n_co=3): exercises the cached-slab
    # "arbitrary" co axis and non-multiple-of-8 Cin padding (5 -> 8).
    check(2, 5, 384, 16, 16)
    print("KERNEL_OK")
</pallas_src>

<mosaic_0001>
module attributes {stable_mosaic.version = 11 : i64} {
  func.func @_wsconv_kernel(%arg0: i32, %arg1: i32, %arg2: memref<2x8x256xf32, #tpu.memory_space<vmem>>, %arg3: memref<6x1x256xf32, #tpu.memory_space<vmem>>, %arg4: memref<8x72xf32, #tpu.memory_space<vmem>>, %arg5: memref<8x1xf32, #tpu.memory_space<vmem>>, %arg6: memref<2x8x256xf32, #tpu.memory_space<vmem>>, %arg7: memref<2x72x256xf32, #tpu.memory_space<vmem>>) attributes {dimension_semantics = [#tpu.dimension_semantics<parallel>, #tpu.dimension_semantics<arbitrary>], iteration_bounds = array<i64: 1, 1>, scalar_prefetch = 0 : i64, scratch_operands = 1 : i64, tpu.core_type = #tpu.core_type<tc>, window_params = [{transform_indices = @transform_0, window_bounds = array<i64: 2, 8, 256>}, {pipeline_mode = #tpu.pipeline_mode<synchronous>, transform_indices = @transform_1, window_bounds = array<i64: 6, 1, 256>}, {transform_indices = @transform_2, window_bounds = array<i64: 8, 72>}, {transform_indices = @transform_3, window_bounds = array<i64: 8, 1>}, {transform_indices = @transform_4, window_bounds = array<i64: 2, 8, 256>}]} {
    %c0 = arith.constant 0 : index
    %c0_0 = arith.constant 0 : index
    %c0_1 = arith.constant 0 : index
    %0 = vector.load %arg2[%c0, %c0_0, %c0_1] : memref<2x8x256xf32, #tpu.memory_space<vmem>>, vector<1x8x256xf32>
    %1 = vector.shape_cast %0 : vector<1x8x256xf32> to vector<8x256xf32>
    %cst = arith.constant 0.000000e+00 : f32
    %2 = vector.broadcast %cst : f32 to vector<8x17xf32>
    %3 = vector.extract_strided_slice %1 {offsets = [0, 0], sizes = [8, 239], strides = [1, 1]} : vector<8x256xf32> to vector<8x239xf32>
    %4 = tpu.concatenate %2, %3 in 1 : vector<8x17xf32>, vector<8x239xf32> -> vector<8x256xf32>
    %c0_2 = arith.constant 0 : index
    %c0_3 = arith.constant 0 : index
    %c0_4 = arith.constant 0 : index
    %5 = vector.load %arg3[%c0_2, %c0_3, %c0_4] : memref<6x1x256xf32, #tpu.memory_space<vmem>>, vector<1x1x256xf32>
    %6 = vector.shape_cast %5 : vector<1x1x256xf32> to vector<1x256xf32>
    %7 = vector.broadcast %6 : vector<1x256xf32> to vector<8x256xf32>
    %8 = arith.mulf %4, %7 : vector<8x256xf32>
    %c0_5 = arith.constant 0 : index
    %c0_6 = arith.constant 0 : index
    %c0_7 = arith.constant 0 : index
    %9 = vector.load %arg7[%c0_5, %c0_6, %c0_7] : memref<2x72x256xf32, #tpu.memory_space<vmem>>, vector<1x8x256xf32>
    %10 = vector.shape_cast %9 : vector<1x8x256xf32> to vector<8x256xf32>
    %11 = vector.shape_cast %8 : vector<8x256xf32> to vector<1x8x256xf32>
    tpu.vector_store %arg7[%c0_5, %c0_6, %c0_7], %11 {strides = array<i32>} : memref<2x72x256xf32, #tpu.memory_space<vmem>>, vector<1x8x256xf32>,
    %cst_8 = arith.constant 0.000000e+00 : f32
    %12 = vector.broadcast %cst_8 : f32 to vector<8x16xf32>
    %13 = vector.extract_strided_slice %1 {offsets = [0, 0], sizes = [8, 240], strides = [1, 1]} : vector<8x256xf32> to vector<8x240xf32>
    %14 = tpu.concatenate %12, %13 in 1 : vector<8x16xf32>, vector<8x240xf32> -> vector<8x256xf32>
    %c0_9 = arith.constant 0 : index
    %c8 = arith.constant 8 : index
    %c0_10 = arith.constant 0 : index
    %15 = vector.load %arg7[%c0_9, %c8, %c0_10] : memref<2x72x256xf32, #tpu.memory_space<vmem>>, vector<1x8x256xf32>
    %16 = vector.shape_cast %15 : vector<1x8x256xf32> to vector<8x256xf32>
    %17 = vector.shape_cast %14 : vector<8x256xf32> to vector<1x8x256xf32>
    tpu.vector_store %arg7[%c0_9, %c8, %c0_10], %17 {strides = array<i32>} : memref<2x72x256xf32, #tpu.memory_space<vmem>>, vector<1x8x256xf32>,
    %cst_11 = arith.constant 0.000000e+00 : f32
    %18 = vector.broadcast %cst_11 : f32 to vector<8x15xf32>
    %19 = vector.extract_strided_slice %1 {offsets = [0, 0], sizes = [8, 241], strides = [1, 1]} : vector<8x256xf32> to vector<8x241xf32>
    %20 = tpu.concatenate %18, %19 in 1 : vector<8x15xf32>, vector<8x241xf32> -> vector<8x256xf32>
    %c1 = arith.constant 1 : index
    %c0_12 = arith.constant 0 : index
    %c0_13 = arith.constant 0 : index
    %21 = vector.load %arg3[%c1, %c0_12, %c0_13] : memref<6x1x256xf32, #tpu.memory_space<vmem>>, vector<1x1x256xf32>
    %22 = vector.shape_cast %21 : vector<1x1x256xf32> to vector<1x256xf32>
    %23 = vector.broadcast %22 : vector<1x256xf32> to vector<8x256xf32>
    %24 = arith.mulf %20, %23 : vector<8x256xf32>
    %c0_14 = arith.constant 0 : index
    %c16 = arith.constant 16 : index
    %c0_15 = arith.constant 0 : index
    %25 = vector.load %arg7[%c0_14, %c16, %c0_15] : memref<2x72x256xf32, #tpu.memory_space<vmem>>, vector<1x8x256xf32>
    %26 = vector.shape_cast %25 : vector<1x8x256xf32> to vector<8x256xf32>
    %27 = vector.shape_cast %24 : vector<8x256xf32> to vector<1x8x256xf32>
    tpu.vector_store %arg7[%c0_14, %c16, %c0_15], %27 {strides = array<i32>} : memref<2x72x256xf32, #tpu.memory_space<vmem>>, vector<1x8x256xf32>,
    %cst_16 = arith.constant 0.000000e+00 : f32
    %28 = vector.broadcast %cst_16 : f32 to vector<8x1xf32>
    %29 = vector.extract_strided_slice %1 {offsets = [0, 0], sizes = [8, 255], strides = [1, 1]} : vector<8x256xf32> to vector<8x255xf32>
    %30 = tpu.concatenate %28, %29 in 1 : vector<8x1xf32>, vector<8x255xf32> -> vector<8x256xf32>
    %c2 = arith.constant 2 : index
    %c0_17 = arith.constant 0 : index
    %c0_18 = arith.constant 0 : index
    %31 = vector.load %arg3[%c2, %c0_17, %c0_18] : memref<6x1x256xf32, #tpu.memory_space<vmem>>, vector<1x1x256xf32>
    %32 = vector.shape_cast %31 : vector<1x1x256xf32> to vector<1x256xf32>
    %33 = vector.broadcast %32 : vector<1x256xf32> to vector<8x256xf32>
    %34 = arith.mulf %30, %33 : vector<8x256xf32>
    %c0_19 = arith.constant 0 : index
    %c24 = arith.constant 24 : index
    %c0_20 = arith.constant 0 : index
    %35 = vector.load %arg7[%c0_19, %c24, %c0_20] : memref<2x72x256xf32, #tpu.memory_space<vmem>>, vector<1x8x256xf32>
    %36 = vector.shape_cast %35 : vector<1x8x256xf32> to vector<8x256xf32>
    %37 = vector.shape_cast %34 : vector<8x256xf32> to vector<1x8x256xf32>
    tpu.vector_store %arg7[%c0_19, %c24, %c0_20], %37 {strides = array<i32>} : memref<2x72x256xf32, #tpu.memory_space<vmem>>, vector<1x8x256xf32>,
    %c0_21 = arith.constant 0 : index
    %c32 = arith.constant 32 : index
    %c0_22 = arith.constant 0 : index
    %38 = vector.load %arg7[%c0_21, %c32, %c0_22] : memref<2x72x256xf32, #tpu.memory_space<vmem>>, vector<1x8x256xf32>
    %39 = vector.shape_cast %38 : vector<1x8x256xf32> to vector<8x256xf32>
    %40 = vector.shape_cast %1 : vector<8x256xf32> to vector<1x8x256xf32>
    tpu.vector_store %arg7[%c0_21, %c32, %c0_22], %40 {strides = array<i32>} : memref<2x72x256xf32, #tpu.memory_space<vmem>>, vector<1x8x256xf32>,
    %41 = vector.extract_strided_slice %1 {offsets = [0, 1], sizes = [8, 255], strides = [1, 1]} : vector<8x256xf32> to vector<8x255xf32>
    %cst_23 = arith.constant 0.000000e+00 : f32
    %42 = vector.broadcast %cst_23 : f32 to vector<8x1xf32>
    %43 = tpu.concatenate %41, %42 in 1 : vector<8x255xf32>, vector<8x1xf32> -> vector<8x256xf32>
    %c3 = arith.constant 3 : index
    %c0_24 = arith.constant 0 : index
    %c0_25 = arith.constant 0 : index
    %44 = vector.load %arg3[%c3, %c0_24, %c0_25] : memref<6x1x256xf32, #tpu.memory_space<vmem>>, vector<1x1x256xf32>
    %45 = vector.shape_cast %44 : vector<1x1x256xf32> to vector<1x256xf32>
    %46 = vector.broadcast %45 : vector<1x256xf32> to vector<8x256xf32>
    %47 = arith.mulf %43, %46 : vector<8x256xf32>
    %c0_26 = arith.constant 0 : index
    %c40 = arith.constant 40 : index
    %c0_27 = arith.constant 0 : index
    %48 = vector.load %arg7[%c0_26, %c40, %c0_27] : memref<2x72x256xf32, #tpu.memory_space<vmem>>, vector<1x8x256xf32>
    %49 = vector.shape_cast %48 : vector<1x8x256xf32> to vector<8x256xf32>
    %50 = vector.shape_cast %47 : vector<8x256xf32> to vector<1x8x256xf32>
    tpu.vector_store %arg7[%c0_26, %c40, %c0_27], %50 {strides = array<i32>} : memref<2x72x256xf32, #tpu.memory_space<vmem>>, vector<1x8x256xf32>,
    %51 = vector.extract_strided_slice %1 {offsets = [0, 15], sizes = [8, 241], strides = [1, 1]} : vector<8x256xf32> to vector<8x241xf32>
    %cst_28 = arith.constant 0.000000e+00 : f32
    %52 = vector.broadcast %cst_28 : f32 to vector<8x15xf32>
    %53 = tpu.concatenate %51, %52 in 1 : vector<8x241xf32>, vector<8x15xf32> -> vector<8x256xf32>
    %c4 = arith.constant 4 : index
    %c0_29 = arith.constant 0 : index
    %c0_30 = arith.constant 0 : index
    %54 = vector.load %arg3[%c4, %c0_29, %c0_30] : memref<6x1x256xf32, #tpu.memory_space<vmem>>, vector<1x1x256xf32>
    %55 = vector.shape_cast %54 : vector<1x1x256xf32> to vector<1x256xf32>
    %56 = vector.broadcast %55 : vector<1x256xf32> to vector<8x256xf32>
    %57 = arith.mulf %53, %56 : vector<8x256xf32>
    %c0_31 = arith.constant 0 : index
    %c48 = arith.constant 48 : index
    %c0_32 = arith.constant 0 : index
    %58 = vector.load %arg7[%c0_31, %c48, %c0_32] : memref<2x72x256xf32, #tpu.memory_space<vmem>>, vector<1x8x256xf32>
    %59 = vector.shape_cast %58 : vector<1x8x256xf32> to vector<8x256xf32>
    %60 = vector.shape_cast %57 : vector<8x256xf32> to vector<1x8x256xf32>
    tpu.vector_store %arg7[%c0_31, %c48, %c0_32], %60 {strides = array<i32>} : memref<2x72x256xf32, #tpu.memory_space<vmem>>, vector<1x8x256xf32>,
    %61 = vector.extract_strided_slice %1 {offsets = [0, 16], sizes = [8, 240], strides = [1, 1]} : vector<8x256xf32> to vector<8x240xf32>
    %cst_33 = arith.constant 0.000000e+00 : f32
    %62 = vector.broadcast %cst_33 : f32 to vector<8x16xf32>
    %63 = tpu.concatenate %61, %62 in 1 : vector<8x240xf32>, vector<8x16xf32> -> vector<8x256xf32>
    %c0_34 = arith.constant 0 : index
    %c56 = arith.constant 56 : index
    %c0_35 = arith.constant 0 : index
    %64 = vector.load %arg7[%c0_34, %c56, %c0_35] : memref<2x72x256xf32, #tpu.memory_space<vmem>>, vector<1x8x256xf32>
    %65 = vector.shape_cast %64 : vector<1x8x256xf32> to vector<8x256xf32>
    %66 = vector.shape_cast %63 : vector<8x256xf32> to vector<1x8x256xf32>
    tpu.vector_store %arg7[%c0_34, %c56, %c0_35], %66 {strides = array<i32>} : memref<2x72x256xf32, #tpu.memory_space<vmem>>, vector<1x8x256xf32>,
    %67 = vector.extract_strided_slice %1 {offsets = [0, 17], sizes = [8, 239], strides = [1, 1]} : vector<8x256xf32> to vector<8x239xf32>
    %cst_36 = arith.constant 0.000000e+00 : f32
    %68 = vector.broadcast %cst_36 : f32 to vector<8x17xf32>
    %69 = tpu.concatenate %67, %68 in 1 : vector<8x239xf32>, vector<8x17xf32> -> vector<8x256xf32>
    %c5 = arith.constant 5 : index
    %c0_37 = arith.constant 0 : index
    %c0_38 = arith.constant 0 : index
    %70 = vector.load %arg3[%c5, %c0_37, %c0_38] : memref<6x1x256xf32, #tpu.memory_space<vmem>>, vector<1x1x256xf32>
    %71 = vector.shape_cast %70 : vector<1x1x256xf32> to vector<1x256xf32>
    %72 = vector.broadcast %71 : vector<1x256xf32> to vector<8x256xf32>
    %73 = arith.mulf %69, %72 : vector<8x256xf32>
    %c0_39 = arith.constant 0 : index
    %c64 = arith.constant 64 : index
    %c0_40 = arith.constant 0 : index
    %74 = vector.load %arg7[%c0_39, %c64, %c0_40] : memref<2x72x256xf32, #tpu.memory_space<vmem>>, vector<1x8x256xf32>
    %75 = vector.shape_cast %74 : vector<1x8x256xf32> to vector<8x256xf32>
    %76 = vector.shape_cast %73 : vector<8x256xf32> to vector<1x8x256xf32>
    tpu.vector_store %arg7[%c0_39, %c64, %c0_40], %76 {strides = array<i32>} : memref<2x72x256xf32, #tpu.memory_space<vmem>>, vector<1x8x256xf32>,
    %c0_41 = arith.constant 0 : index
    %c0_42 = arith.constant 0 : index
    %77 = vector.load %arg4[%c0_41, %c0_42] : memref<8x72xf32, #tpu.memory_space<vmem>>, vector<8x72xf32>
    %c0_43 = arith.constant 0 : index
    %c0_44 = arith.constant 0 : index
    %c0_45 = arith.constant 0 : index
    %78 = vector.load %arg7[%c0_43, %c0_44, %c0_45] : memref<2x72x256xf32, #tpu.memory_space<vmem>>, vector<1x72x256xf32>
    %79 = vector.shape_cast %78 : vector<1x72x256xf32> to vector<72x256xf32>
    %cst_46 = arith.constant dense<0.000000e+00> : vector<8x256xf32>
    %80 = tpu.matmul %77, %79, %cst_46 {dimension_numbers = #tpu.dot_dimension_numbers<[1], [0], [0], [1], [0, 0, 1, 1], [], []>} : vector<8x72xf32>, vector<72x256xf32>, vector<8x256xf32> -> vector<8x256xf32>
    %c0_47 = arith.constant 0 : index
    %c0_48 = arith.constant 0 : index
    %81 = vector.load %arg5[%c0_47, %c0_48] : memref<8x1xf32, #tpu.memory_space<vmem>>, vector<8x1xf32>
    %82 = vector.broadcast %81 : vector<8x1xf32> to vector<8x256xf32>
    %83 = arith.addf %80, %82 : vector<8x256xf32>
    %c0_49 = arith.constant 0 : index
    %c0_50 = arith.constant 0 : index
    %c0_51 = arith.constant 0 : index
    %84 = vector.load %arg6[%c0_49, %c0_50, %c0_51] : memref<2x8x256xf32, #tpu.memory_space<vmem>>, vector<1x8x256xf32>
    %85 = vector.shape_cast %84 : vector<1x8x256xf32> to vector<8x256xf32>
    %86 = vector.shape_cast %83 : vector<8x256xf32> to vector<1x8x256xf32>
    tpu.vector_store %arg6[%c0_49, %c0_50, %c0_51], %86 {strides = array<i32>} : memref<2x8x256xf32, #tpu.memory_space<vmem>>, vector<1x8x256xf32>,
    %c1_52 = arith.constant 1 : index
    %c0_53 = arith.constant 0 : index
    %c0_54 = arith.constant 0 : index
    %87 = vector.load %arg2[%c1_52, %c0_53, %c0_54] : memref<2x8x256xf32, #tpu.memory_space<vmem>>, vector<1x8x256xf32>
    %88 = vector.shape_cast %87 : vector<1x8x256xf32> to vector<8x256xf32>
    %cst_55 = arith.constant 0.000000e+00 : f32
    %89 = vector.broadcast %cst_55 : f32 to vector<8x17xf32>
    %90 = vector.extract_strided_slice %88 {offsets = [0, 0], sizes = [8, 239], strides = [1, 1]} : vector<8x256xf32> to vector<8x239xf32>
    %91 = tpu.concatenate %89, %90 in 1 : vector<8x17xf32>, vector<8x239xf32> -> vector<8x256xf32>
    %c0_56 = arith.constant 0 : index
    %c0_57 = arith.constant 0 : index
    %c0_58 = arith.constant 0 : index
    %92 = vector.load %arg3[%c0_56, %c0_57, %c0_58] : memref<6x1x256xf32, #tpu.memory_space<vmem>>, vector<1x1x256xf32>
    %93 = vector.shape_cast %92 : vector<1x1x256xf32> to vector<1x256xf32>
    %94 = vector.broadcast %93 : vector<1x256xf32> to vector<8x256xf32>
    %95 = arith.mulf %91, %94 : vector<8x256xf32>
    %c1_59 = arith.constant 1 : index
    %c0_60 = arith.constant 0 : index
    %c0_61 = arith.constant 0 : index
    %96 = vector.load %arg7[%c1_59, %c0_60, %c0_61] : memref<2x72x256xf32, #tpu.memory_space<vmem>>, vector<1x8x256xf32>
    %97 = vector.shape_cast %96 : vector<1x8x256xf32> to vector<8x256xf32>
    %98 = vector.shape_cast %95 : vector<8x256xf32> to vector<1x8x256xf32>
    tpu.vector_store %arg7[%c1_59, %c0_60, %c0_61], %98 {strides = array<i32>} : memref<2x72x256xf32, #tpu.memory_space<vmem>>, vector<1x8x256xf32>,
    %cst_62 = arith.constant 0.000000e+00 : f32
    %99 = vector.broadcast %cst_62 : f32 to vector<8x16xf32>
    %100 = vector.extract_strided_slice %88 {offsets = [0, 0], sizes = [8, 240], strides = [1, 1]} : vector<8x256xf32> to vector<8x240xf32>
    %101 = tpu.concatenate %99, %100 in 1 : vector<8x16xf32>, vector<8x240xf32> -> vector<8x256xf32>
    %c1_63 = arith.constant 1 : index
    %c8_64 = arith.constant 8 : index
    %c0_65 = arith.constant 0 : index
    %102 = vector.load %arg7[%c1_63, %c8_64, %c0_65] : memref<2x72x256xf32, #tpu.memory_space<vmem>>, vector<1x8x256xf32>
    %103 = vector.shape_cast %102 : vector<1x8x256xf32> to vector<8x256xf32>
    %104 = vector.shape_cast %101 : vector<8x256xf32> to vector<1x8x256xf32>
    tpu.vector_store %arg7[%c1_63, %c8_64, %c0_65], %104 {strides = array<i32>} : memref<2x72x256xf32, #tpu.memory_space<vmem>>, vector<1x8x256xf32>,
    %cst_66 = arith.constant 0.000000e+00 : f32
    %105 = vector.broadcast %cst_66 : f32 to vector<8x15xf32>
    %106 = vector.extract_strided_slice %88 {offsets = [0, 0], sizes = [8, 241], strides = [1, 1]} : vector<8x256xf32> to vector<8x241xf32>
    %107 = tpu.concatenate %105, %106 in 1 : vector<8x15xf32>, vector<8x241xf32> -> vector<8x256xf32>
    %c1_67 = arith.constant 1 : index
    %c0_68 = arith.constant 0 : index
    %c0_69 = arith.constant 0 : index
    %108 = vector.load %arg3[%c1_67, %c0_68, %c0_69] : memref<6x1x256xf32, #tpu.memory_space<vmem>>, vector<1x1x256xf32>
    %109 = vector.shape_cast %108 : vector<1x1x256xf32> to vector<1x256xf32>
    %110 = vector.broadcast %109 : vector<1x256xf32> to vector<8x256xf32>
    %111 = arith.mulf %107, %110 : vector<8x256xf32>
    %c1_70 = arith.constant 1 : index
    %c16_71 = arith.constant 16 : index
    %c0_72 = arith.constant 0 : index
    %112 = vector.load %arg7[%c1_70, %c16_71, %c0_72] : memref<2x72x256xf32, #tpu.memory_space<vmem>>, vector<1x8x256xf32>
    %113 = vector.shape_cast %112 : vector<1x8x256xf32> to vector<8x256xf32>
    %114 = vector.shape_cast %111 : vector<8x256xf32> to vector<1x8x256xf32>
    tpu.vector_store %arg7[%c1_70, %c16_71, %c0_72], %114 {strides = array<i32>} : memref<2x72x256xf32, #tpu.memory_space<vmem>>, vector<1x8x256xf32>,
    %cst_73 = arith.constant 0.000000e+00 : f32
    %115 = vector.broadcast %cst_73 : f32 to vector<8x1xf32>
    %116 = vector.extract_strided_slice %88 {offsets = [0, 0], sizes = [8, 255], strides = [1, 1]} : vector<8x256xf32> to vector<8x255xf32>
    %117 = tpu.concatenate %115, %116 in 1 : vector<8x1xf32>, vector<8x255xf32> -> vector<8x256xf32>
    %c2_74 = arith.constant 2 : index
    %c0_75 = arith.constant 0 : index
    %c0_76 = arith.constant 0 : index
    %118 = vector.load %arg3[%c2_74, %c0_75, %c0_76] : memref<6x1x256xf32, #tpu.memory_space<vmem>>, vector<1x1x256xf32>
    %119 = vector.shape_cast %118 : vector<1x1x256xf32> to vector<1x256xf32>
    %120 = vector.broadcast %119 : vector<1x256xf32> to vector<8x256xf32>
    %121 = arith.mulf %117, %120 : vector<8x256xf32>
    %c1_77 = arith.constant 1 : index
    %c24_78 = arith.constant 24 : index
    %c0_79 = arith.constant 0 : index
    %122 = vector.load %arg7[%c1_77, %c24_78, %c0_79] : memref<2x72x256xf32, #tpu.memory_space<vmem>>, vector<1x8x256xf32>
    %123 = vector.shape_cast %122 : vector<1x8x256xf32> to vector<8x256xf32>
    %124 = vector.shape_cast %121 : vector<8x256xf32> to vector<1x8x256xf32>
    tpu.vector_store %arg7[%c1_77, %c24_78, %c0_79], %124 {strides = array<i32>} : memref<2x72x256xf32, #tpu.memory_space<vmem>>, vector<1x8x256xf32>,
    %c1_80 = arith.constant 1 : index
    %c32_81 = arith.constant 32 : index
    %c0_82 = arith.constant 0 : index
    %125 = vector.load %arg7[%c1_80, %c32_81, %c0_82] : memref<2x72x256xf32, #tpu.memory_space<vmem>>, vector<1x8x256xf32>
    %126 = vector.shape_cast %125 : vector<1x8x256xf32> to vector<8x256xf32>
    %127 = vector.shape_cast %88 : vector<8x256xf32> to vector<1x8x256xf32>
    tpu.vector_store %arg7[%c1_80, %c32_81, %c0_82], %127 {strides = array<i32>} : memref<2x72x256xf32, #tpu.memory_space<vmem>>, vector<1x8x256xf32>,
    %128 = vector.extract_strided_slice %88 {offsets = [0, 1], sizes = [8, 255], strides = [1, 1]} : vector<8x256xf32> to vector<8x255xf32>
    %cst_83 = arith.constant 0.000000e+00 : f32
    %129 = vector.broadcast %cst_83 : f32 to vector<8x1xf32>
    %130 = tpu.concatenate %128, %129 in 1 : vector<8x255xf32>, vector<8x1xf32> -> vector<8x256xf32>
    %c3_84 = arith.constant 3 : index
    %c0_85 = arith.constant 0 : index
    %c0_86 = arith.constant 0 : index
    %131 = vector.load %arg3[%c3_84, %c0_85, %c0_86] : memref<6x1x256xf32, #tpu.memory_space<vmem>>, vector<1x1x256xf32>
    %132 = vector.shape_cast %131 : vector<1x1x256xf32> to vector<1x256xf32>
    %133 = vector.broadcast %132 : vector<1x256xf32> to vector<8x256xf32>
    %134 = arith.mulf %130, %133 : vector<8x256xf32>
    %c1_87 = arith.constant 1 : index
    %c40_88 = arith.constant 40 : index
    %c0_89 = arith.constant 0 : index
    %135 = vector.load %arg7[%c1_87, %c40_88, %c0_89] : memref<2x72x256xf32, #tpu.memory_space<vmem>>, vector<1x8x256xf32>
    %136 = vector.shape_cast %135 : vector<1x8x256xf32> to vector<8x256xf32>
    %137 = vector.shape_cast %134 : vector<8x256xf32> to vector<1x8x256xf32>
    tpu.vector_store %arg7[%c1_87, %c40_88, %c0_89], %137 {strides = array<i32>} : memref<2x72x256xf32, #tpu.memory_space<vmem>>, vector<1x8x256xf32>,
    %138 = vector.extract_strided_slice %88 {offsets = [0, 15], sizes = [8, 241], strides = [1, 1]} : vector<8x256xf32> to vector<8x241xf32>
    %cst_90 = arith.constant 0.000000e+00 : f32
    %139 = vector.broadcast %cst_90 : f32 to vector<8x15xf32>
    %140 = tpu.concatenate %138, %139 in 1 : vector<8x241xf32>, vector<8x15xf32> -> vector<8x256xf32>
    %c4_91 = arith.constant 4 : index
    %c0_92 = arith.constant 0 : index
    %c0_93 = arith.constant 0 : index
    %141 = vector.load %arg3[%c4_91, %c0_92, %c0_93] : memref<6x1x256xf32, #tpu.memory_space<vmem>>, vector<1x1x256xf32>
    %142 = vector.shape_cast %141 : vector<1x1x256xf32> to vector<1x256xf32>
    %143 = vector.broadcast %142 : vector<1x256xf32> to vector<8x256xf32>
    %144 = arith.mulf %140, %143 : vector<8x256xf32>
    %c1_94 = arith.constant 1 : index
    %c48_95 = arith.constant 48 : index
    %c0_96 = arith.constant 0 : index
    %145 = vector.load %arg7[%c1_94, %c48_95, %c0_96] : memref<2x72x256xf32, #tpu.memory_space<vmem>>, vector<1x8x256xf32>
    %146 = vector.shape_cast %145 : vector<1x8x256xf32> to vector<8x256xf32>
    %147 = vector.shape_cast %144 : vector<8x256xf32> to vector<1x8x256xf32>
    tpu.vector_store %arg7[%c1_94, %c48_95, %c0_96], %147 {strides = array<i32>} : memref<2x72x256xf32, #tpu.memory_space<vmem>>, vector<1x8x256xf32>,
    %148 = vector.extract_strided_slice %88 {offsets = [0, 16], sizes = [8, 240], strides = [1, 1]} : vector<8x256xf32> to vector<8x240xf32>
    %cst_97 = arith.constant 0.000000e+00 : f32
    %149 = vector.broadcast %cst_97 : f32 to vector<8x16xf32>
    %150 = tpu.concatenate %148, %149 in 1 : vector<8x240xf32>, vector<8x16xf32> -> vector<8x256xf32>
    %c1_98 = arith.constant 1 : index
    %c56_99 = arith.constant 56 : index
    %c0_100 = arith.constant 0 : index
    %151 = vector.load %arg7[%c1_98, %c56_99, %c0_100] : memref<2x72x256xf32, #tpu.memory_space<vmem>>, vector<1x8x256xf32>
    %152 = vector.shape_cast %151 : vector<1x8x256xf32> to vector<8x256xf32>
    %153 = vector.shape_cast %150 : vector<8x256xf32> to vector<1x8x256xf32>
    tpu.vector_store %arg7[%c1_98, %c56_99, %c0_100], %153 {strides = array<i32>} : memref<2x72x256xf32, #tpu.memory_space<vmem>>, vector<1x8x256xf32>,
    %154 = vector.extract_strided_slice %88 {offsets = [0, 17], sizes = [8, 239], strides = [1, 1]} : vector<8x256xf32> to vector<8x239xf32>
    %cst_101 = arith.constant 0.000000e+00 : f32
    %155 = vector.broadcast %cst_101 : f32 to vector<8x17xf32>
    %156 = tpu.concatenate %154, %155 in 1 : vector<8x239xf32>, vector<8x17xf32> -> vector<8x256xf32>
    %c5_102 = arith.constant 5 : index
    %c0_103 = arith.constant 0 : index
    %c0_104 = arith.constant 0 : index
    %157 = vector.load %arg3[%c5_102, %c0_103, %c0_104] : memref<6x1x256xf32, #tpu.memory_space<vmem>>, vector<1x1x256xf32>
    %158 = vector.shape_cast %157 : vector<1x1x256xf32> to vector<1x256xf32>
    %159 = vector.broadcast %158 : vector<1x256xf32> to vector<8x256xf32>
    %160 = arith.mulf %156, %159 : vector<8x256xf32>
    %c1_105 = arith.constant 1 : index
    %c64_106 = arith.constant 64 : index
    %c0_107 = arith.constant 0 : index
    %161 = vector.load %arg7[%c1_105, %c64_106, %c0_107] : memref<2x72x256xf32, #tpu.memory_space<vmem>>, vector<1x8x256xf32>
    %162 = vector.shape_cast %161 : vector<1x8x256xf32> to vector<8x256xf32>
    %163 = vector.shape_cast %160 : vector<8x256xf32> to vector<1x8x256xf32>
    tpu.vector_store %arg7[%c1_105, %c64_106, %c0_107], %163 {strides = array<i32>} : memref<2x72x256xf32, #tpu.memory_space<vmem>>, vector<1x8x256xf32>,
    %c0_108 = arith.constant 0 : index
    %c0_109 = arith.constant 0 : index
    %164 = vector.load %arg4[%c0_108, %c0_109] : memref<8x72xf32, #tpu.memory_space<vmem>>, vector<8x72xf32>
    %c1_110 = arith.constant 1 : index
    %c0_111 = arith.constant 0 : index
    %c0_112 = arith.constant 0 : index
    %165 = vector.load %arg7[%c1_110, %c0_111, %c0_112] : memref<2x72x256xf32, #tpu.memory_space<vmem>>, vector<1x72x256xf32>
    %166 = vector.shape_cast %165 : vector<1x72x256xf32> to vector<72x256xf32>
    %cst_113 = arith.constant dense<0.000000e+00> : vector<8x256xf32>
    %167 = tpu.matmul %164, %166, %cst_113 {dimension_numbers = #tpu.dot_dimension_numbers<[1], [0], [0], [1], [0, 0, 1, 1], [], []>} : vector<8x72xf32>, vector<72x256xf32>, vector<8x256xf32> -> vector<8x256xf32>
    %c0_114 = arith.constant 0 : index
    %c0_115 = arith.constant 0 : index
    %168 = vector.load %arg5[%c0_114, %c0_115] : memref<8x1xf32, #tpu.memory_space<vmem>>, vector<8x1xf32>
    %169 = vector.broadcast %168 : vector<8x1xf32> to vector<8x256xf32>
    %170 = arith.addf %167, %169 : vector<8x256xf32>
    %c1_116 = arith.constant 1 : index
    %c0_117 = arith.constant 0 : index
    %c0_118 = arith.constant 0 : index
    %171 = vector.load %arg6[%c1_116, %c0_117, %c0_118] : memref<2x8x256xf32, #tpu.memory_space<vmem>>, vector<1x8x256xf32>
    %172 = vector.shape_cast %171 : vector<1x8x256xf32> to vector<8x256xf32>
    %173 = vector.shape_cast %170 : vector<8x256xf32> to vector<1x8x256xf32>
    tpu.vector_store %arg6[%c1_116, %c0_117, %c0_118], %173 {strides = array<i32>} : memref<2x8x256xf32, #tpu.memory_space<vmem>>, vector<1x8x256xf32>,
    return
  }
  func.func @transform_0(%arg0: i32, %arg1: i32) -> (i32, i32, i32) {
    %c0_i32 = arith.constant 0 : i32
    %c0_i32_0 = arith.constant 0 : i32
    %c0_i32_1 = arith.constant 0 : i32
    return %arg0, %c0_i32, %c0_i32_0 : i32, i32, i32
  }
  func.func @transform_1(%arg0: i32, %arg1: i32) -> (i32, i32, i32) {
    %c0_i32 = arith.constant 0 : i32
    %c0_i32_0 = arith.constant 0 : i32
    %c0_i32_1 = arith.constant 0 : i32
    %c0_i32_2 = arith.constant 0 : i32
    return %c0_i32, %c0_i32_0, %c0_i32_1 : i32, i32, i32
  }
  func.func @transform_2(%arg0: i32, %arg1: i32) -> (i32, i32) {
    %c0_i32 = arith.constant 0 : i32
    %c0_i32_0 = arith.constant 0 : i32
    return %arg1, %c0_i32 : i32, i32
  }
  func.func @transform_3(%arg0: i32, %arg1: i32) -> (i32, i32) {
    %c0_i32 = arith.constant 0 : i32
    %c0_i32_0 = arith.constant 0 : i32
    return %arg1, %c0_i32 : i32, i32
  }
  func.func @transform_4(%arg0: i32, %arg1: i32) -> (i32, i32, i32) {
    %c0_i32 = arith.constant 0 : i32
    %c0_i32_0 = arith.constant 0 : i32
    return %arg0, %arg1, %c0_i32 : i32, i32, i32
  }
}

</mosaic_0001>

<llo_original>
// kernel: tpu_custom_call.1
$region0: #{tpu_custom_call.1}
  #allocation0 [shape = 'u32[]', space=smem, size = 0x4, offset = 0x4, fixed_abs, tag = 'smem constant byte address 0x4 - core index']
  #allocation1 [shape = 'u32[144,128]{1,0:T(1,128)}', space=vmem, size = 0x12000, scoped, tag = 'internal scratch']
  #allocation2 [shape = 'f32[2,72,256]{2,1,0:T(8,128)}', space=vmem, size = 0x24000, scoped, tag = 'scratch operand']
  %s0 = inlined_call_operand.hbm [shape: f32[2,8,256], index: 0, kind: input, shape index: {}]
  %s1 = inlined_call_operand.vmem [shape: f32[6,1,256], index: 1, kind: input, shape index: {}]
  %s2 = inlined_call_operand.hbm [shape: f32[8,72], index: 2, kind: input, shape index: {}]
  %s3 = inlined_call_operand.vmem [shape: f32[8,1], index: 3, kind: input, shape index: {}]
  %s4 = inlined_call_operand.hbm [shape: f32[2,8,256], index: 4, kind: output, shape index: {}]
  %s5 = sld [smem:[#allocation0]]
  $region34: #{tpu_custom_call.1} parent=0
    _
  %s7 = ssub.s32 1, %s5
  %s8 = scalar_select 0, %s7, %s5
  $region1: #{tpu_custom_call.1} parent=0
    #allocation3 [shape = 'u8[16384]{0}', space=vmem, size = 0x4000, scoped, tag = 'input window, operand 0, single buffered']
    #allocation4 [shape = 's32[1]{0}', space=sflag, size = 0x4, scoped, tag = 'scoped memory for tpu_custom_call.1']
    #allocation5 [shape = 's32[1]{0}', space=sflag, size = 0x4, scoped, tag = 'scoped memory for tpu_custom_call.1']
    #allocation6 [shape = 'u8[4096]{0}', space=vmem, size = 0x1000, scoped, tag = 'input window, operand 2, single buffered']
    #allocation7 [shape = 's32[1]{0}', space=sflag, size = 0x4, scoped, tag = 'scoped memory for tpu_custom_call.1']
    #allocation8 [shape = 'u8[16384]{0}', space=vmem, size = 0x4000, scoped, tag = 'output window, operand 0, single buffered']
    %9 = vsyncpa [#allocation4], 0
    %10 = vsyncpa [#allocation7], 0
    %11 = vsyncpa [#allocation5], 0
    // Predicated region
    $region2: #{tpu_custom_call.1} parent=1 // pred_check
      _
    $region3: #{tpu_custom_call.1} parent=1 // pred_check_branch
      %13 = sbr.rel (0) target = $region5
    $region4: #{tpu_custom_call.1} parent=1 // pred_region
      %s15 = ssub.s32 512, 512
      %16 = vsyncadd [#allocation4], %s15
      %s17 = sshll.u32 [#allocation3], 4
      %s18 = int_to_ptr.vmem [resolvable:$true] %s17
      %23 = dma.hbm_to_vmem [thread:$0]  %s0, 512, %s18, [#allocation4], 256, 256, 16
    $region5: #{tpu_custom_call.1} parent=1 // pred_fallthru
      _
    // Predicated region
    $region6: #{tpu_custom_call.1} parent=1 // pred_check
      _
    $region7: #{tpu_custom_call.1} parent=1 // pred_check_branch
      %25 = sbr.rel (0) target = $region9
    $region8: #{tpu_custom_call.1} parent=1 // pred_region
      _
    $region9: #{tpu_custom_call.1} parent=1 // pred_fallthru
      _
    // Predicated region
    $region10: #{tpu_custom_call.1} parent=1 // pred_check
      _
    $region11: #{tpu_custom_call.1} parent=1 // pred_check_branch
      %27 = sbr.rel (0) target = $region13
    $region12: #{tpu_custom_call.1} parent=1 // pred_region
      %s29 = ssub.s32 128, 128
      %30 = vsyncadd [#allocation7], %s29
      %s32 = sshll.u32 [#allocation6], 4
      %s33 = int_to_ptr.vmem [resolvable:$true] %s32
      %35 = dma.hbm_to_vmem [thread:$0]  %s2, 128, %s33, [#allocation7]
    $region13: #{tpu_custom_call.1} parent=1 // pred_fallthru
      _
    // Predicated region
    $region14: #{tpu_custom_call.1} parent=1 // pred_check
      _
    $region15: #{tpu_custom_call.1} parent=1 // pred_check_branch
      %37 = sbr.rel (0) target = $region17
    $region16: #{tpu_custom_call.1} parent=1 // pred_region
      _
    $region17: #{tpu_custom_call.1} parent=1 // pred_fallthru
      _
    // Predicated region
    $region18: #{tpu_custom_call.1} parent=1 // pred_check
      _
    $region19: #{tpu_custom_call.1} parent=1 // pred_check_branch
      %39 = sbr.rel (0) target = $region21
    $region20: #{tpu_custom_call.1} parent=1 // pred_region
      %40 = dma.done [#allocation4], 512
    $region21: #{tpu_custom_call.1} parent=1 // pred_fallthru
      _
    // Predicated region
    $region22: #{tpu_custom_call.1} parent=1 // pred_check
      _
    $region23: #{tpu_custom_call.1} parent=1 // pred_check_branch
      %42 = sbr.rel (0) target = $region25
    $region24: #{tpu_custom_call.1} parent=1 // pred_region
      %43 = dma.done [#allocation7], 128
    $region25: #{tpu_custom_call.1} parent=1 // pred_fallthru
      _
    %v44 = vld [vmem:[#allocation3] sm:$0xff]
    %v45 = vld [vmem:[#allocation3 + $0x8] sm:$0xff]
    %48 = vrot.lane.b32.xlu0 %v44, 17
    %v49 = vpop.permute.xlu0 %48
    %50 = vrot.lane.b32.xlu0 %v45, 17
    %v51 = vpop.permute.xlu0 %50
    %vm52 = vcmask 138240
    %v53 = vsel %vm52, %v49, %v51
    %v56 = vsel %vm52, 0.0, %v49
    %v57 = vld [vmem:[%s1] sm:$0x3]
    %v59 = vlaneseq
    %v60 = vshrl.u32 %v59, 7
    %v61 = vsub.s32 0, %v60
    %v62 = vrot.slane %v57, %v61
    %v63 = vlaneseq
    %v64 = vshrl.u32 %v63, 7
    %v65 = vsub.s32 1, %v64
    %v66 = vrot.slane %v57, %v65
    %v69 = vmul.f32 %v56, %v62
    %v70 = vmul.f32 %v53, %v66
    %71 = vst [vmem:[#allocation2] sm:$0xff] %v69
    %72 = vst [vmem:[#allocation2 + $0x8] sm:$0xff] %v70
    %73 = vrot.lane.b32.xlu0 %v44, 16
    %v74 = vpop.permute.xlu0 %73
    %75 = vrot.lane.b32.xlu0 %v45, 16
    %v76 = vpop.permute.xlu0 %75
    %vm77 = vcmask 130048
    %v78 = vsel %vm77, %v74, %v76
    %v81 = vsel %vm77, 0.0, %v74
    %82 = vst [vmem:[#allocation2 + $0x10] sm:$0xff] %v81
    %83 = vst [vmem:[#allocation2 + $0x18] sm:$0xff] %v78
    %84 = vrot.lane.b32.xlu0 %v44, 15
    %v85 = vpop.permute.xlu0 %84
    %86 = vrot.lane.b32.xlu0 %v45, 15
    %v87 = vpop.permute.xlu0 %86
    %vm88 = vcmask 121856
    %v89 = vsel %vm88, %v85, %v87
    %v92 = vsel %vm88, 0.0, %v85
    %s93 = scalar_lea.vmem %s1, 2
    %v94 = vld [vmem:[%s93] sm:$0x3]
    %v96 = vlaneseq
    %v97 = vshrl.u32 %v96, 7
    %v98 = vsub.s32 0, %v97
    %v99 = vrot.slane %v94, %v98
    %v100 = vlaneseq
    %v101 = vshrl.u32 %v100, 7
    %v102 = vsub.s32 1, %v101
    %v103 = vrot.slane %v94, %v102
    %v106 = vmul.f32 %v92, %v99
    %v107 = vmul.f32 %v89, %v103
    %108 = vst [vmem:[#allocation2 + $0x20] sm:$0xff] %v106
    %109 = vst [vmem:[#allocation2 + $0x28] sm:$0xff] %v107
    %110 = vrot.lane.b32.xlu0 %v44, 1
    %v111 = vpop.permute.xlu0 %110
    %112 = vrot.lane.b32.xlu0 %v45, 1
    %v113 = vpop.permute.xlu0 %112
    %vm114 = vcmask 7168
    %v115 = vsel %vm114, %v111, %v113
    %v118 = vsel %vm114, 0.0, %v111
    %s119 = scalar_lea.vmem %s1, 4
    %v120 = vld [vmem:[%s119] sm:$0x3]
    %v122 = vlaneseq
    %v123 = vshrl.u32 %v122, 7
    %v124 = vsub.s32 0, %v123
    %v125 = vrot.slane %v120, %v124
    %v126 = vlaneseq
    %v127 = vshrl.u32 %v126, 7
    %v128 = vsub.s32 1, %v127
    %v129 = vrot.slane %v120, %v128
    %v132 = vmul.f32 %v118, %v125
    %v133 = vmul.f32 %v115, %v129
    %134 = vst [vmem:[#allocation2 + $0x30] sm:$0xff] %v132
    %135 = vst [vmem:[#allocation2 + $0x38] sm:$0xff] %v133
    %136 = vst [vmem:[#allocation2 + $0x40] sm:$0xff] %v44
    %137 = vst [vmem:[#allocation2 + $0x48] sm:$0xff] %v45
    %138 = vrot.lane.b32.xlu0 %v44, 127
    %v139 = vpop.permute.xlu0 %138
    %140 = vrot.lane.b32.xlu0 %v45, 127
    %v141 = vpop.permute.xlu0 %140
    %vm142 = vcmask 1039360
    %v143 = vsel %vm142, %v139, %v141
    %v146 = vsel %vm142, %v141, 0.0
    %s147 = scalar_lea.vmem %s1, 6
    %v148 = vld [vmem:[%s147] sm:$0x3]
    %v150 = vlaneseq
    %v151 = vshrl.u32 %v150, 7
    %v152 = vsub.s32 0, %v151
    %v153 = vrot.slane %v148, %v152
    %v154 = vlaneseq
    %v155 = vshrl.u32 %v154, 7
    %v156 = vsub.s32 1, %v155
    %v157 = vrot.slane %v148, %v156
    %v160 = vmul.f32 %v143, %v153
    %v161 = vmul.f32 %v146, %v157
    %162 = vst [vmem:[#allocation2 + $0x50] sm:$0xff] %v160
    %163 = vst [vmem:[#allocation2 + $0x58] sm:$0xff] %v161
    %164 = vrot.lane.b32.xlu0 %v44, 113
    %v165 = vpop.permute.xlu0 %164
    %166 = vrot.lane.b32.xlu0 %v45, 113
    %v167 = vpop.permute.xlu0 %166
    %vm168 = vcmask 924672
    %v169 = vsel %vm168, %v165, %v167
    %v172 = vsel %vm168, %v167, 0.0
    %s173 = scalar_lea.vmem %s1, 8
    %v174 = vld [vmem:[%s173] sm:$0x3]
    %v176 = vlaneseq
    %v177 = vshrl.u32 %v176, 7
    %v178 = vsub.s32 0, %v177
    %v179 = vrot.slane %v174, %v178
    %v180 = vlaneseq
    %v181 = vshrl.u32 %v180, 7
    %v182 = vsub.s32 1, %v181
    %v183 = vrot.slane %v174, %v182
    %v186 = vmul.f32 %v169, %v179
    %v187 = vmul.f32 %v172, %v183
    %188 = vst [vmem:[#allocation2 + $0x60] sm:$0xff] %v186
    %189 = vst [vmem:[#allocation2 + $0x68] sm:$0xff] %v187
    %190 = vrot.lane.b32.xlu0 %v44, 112
    %v191 = vpop.permute.xlu0 %190
    %192 = vrot.lane.b32.xlu0 %v45, 112
    %v193 = vpop.permute.xlu0 %192
    %vm194 = vcmask 916480
    %v195 = vsel %vm194, %v191, %v193
    %v198 = vsel %vm194, %v193, 0.0
    %199 = vst [vmem:[#allocation2 + $0x70] sm:$0xff] %v195
    %200 = vst [vmem:[#allocation2 + $0x78] sm:$0xff] %v198
    %201 = vrot.lane.b32.xlu0 %v44, 111
    %v202 = vpop.permute.xlu0 %201
    %203 = vrot.lane.b32.xlu0 %v45, 111
    %v204 = vpop.permute.xlu0 %203
    %vm205 = vcmask 908288
    %v206 = vsel %vm205, %v202, %v204
    %v209 = vsel %vm205, %v204, 0.0
    %s210 = scalar_lea.vmem %s1, 10
    %v211 = vld [vmem:[%s210] sm:$0x3]
    %v213 = vlaneseq
    %v214 = vshrl.u32 %v213, 7
    %v215 = vsub.s32 0, %v214
    %v216 = vrot.slane %v211, %v215
    %v217 = vlaneseq
    %v218 = vshrl.u32 %v217, 7
    %v219 = vsub.s32 1, %v218
    %v220 = vrot.slane %v211, %v219
    %v223 = vmul.f32 %v206, %v216
    %v224 = vmul.f32 %v209, %v220
    %225 = vst [vmem:[#allocation2 + $0x80] sm:$0xff] %v223
    %226 = vst [vmem:[#allocation2 + $0x88] sm:$0xff] %v224
    %v227 = vld [vmem:[#allocation6] sm:$0xff]
    %v228 = vld [vmem:[#allocation2] sm:$0xff]
    %v229 = vld [vmem:[#allocation2 + $0x8] sm:$0xff]
    %v230 = vld [vmem:[#allocation2 + $0x10] sm:$0xff]
    %v231 = vld [vmem:[#allocation2 + $0x18] sm:$0xff]
    %v232 = vld [vmem:[#allocation2 + $0x20] sm:$0xff]
    %v233 = vld [vmem:[#allocation2 + $0x28] sm:$0xff]
    %v234 = vld [vmem:[#allocation2 + $0x30] sm:$0xff]
    %v235 = vld [vmem:[#allocation2 + $0x38] sm:$0xff]
    %v236 = vld [vmem:[#allocation2 + $0x40] sm:$0xff]
    %v237 = vld [vmem:[#allocation2 + $0x48] sm:$0xff]
    %v238 = vld [vmem:[#allocation2 + $0x50] sm:$0xff]
    %v239 = vld [vmem:[#allocation2 + $0x58] sm:$0xff]
    %v240 = vld [vmem:[#allocation2 + $0x60] sm:$0xff]
    %v241 = vld [vmem:[#allocation2 + $0x68] sm:$0xff]
    %v242 = vld [vmem:[#allocation2 + $0x70] sm:$0xff]
    %v243 = vld [vmem:[#allocation2 + $0x78] sm:$0xff]
    %v244 = vld [vmem:[#allocation2 + $0x80] sm:$0xff]
    %v245 = vld [vmem:[#allocation2 + $0x88] sm:$0xff]
    %v246 = vld [vmem:[%s3] sm:$0xff]
    %248 = vset.pattern.permute.xlu0 0
    %249 = vperm.xlu0 %248, %v246
    %v250 = vpop.permute.xlu0 %249
    %vm252 = vcmask 588800
    %v254 = vsel %vm252, %v227, 0
    %256 = vmatprep.subr.mxu0 %v229
    %257 = vmatpush1.msra.mxu0 %v228
    %258 = vmatprep.subr.mxu0 %v231
    %259 = vmatpush1.msra.mxu0 %v230
    %260 = vmatprep.subr.mxu0 %v233
    %261 = vmatpush1.msra.mxu0 %v232
    %262 = vmatprep.subr.mxu0 %v235
    %263 = vmatpush1.msra.mxu0 %v234
    %264 = vmatprep.subr.mxu0 %v237
    %265 = vmatpush1.msra.mxu0 %v236
    %266 = vmatprep.subr.mxu0 %v239
    %267 = vmatpush1.msra.mxu0 %v238
    %268 = vmatprep.subr.mxu0 %v241
    %269 = vmatpush1.msra.mxu0 %v240
    %270 = vmatprep.subr.mxu0 %v243
    %271 = vmatpush1.msra.mxu0 %v242
    %272 = vmatprep.subr.mxu0 %v245
    %273 = vmatpush1.msra.mxu0 %v244
    %274 = vmatprep.subr.mxu0 0.0
    %275 = vmatpush1.msra.mxu0 0.0
    %276 = vmatprep.subr.mxu0 0.0
    %277 = vmatpush1.msra.mxu0 0.0
    %278 = vmatprep.subr.mxu0 0.0
    %279 = vmatpush1.msra.mxu0 0.0
    %280 = vmatprep.subr.mxu0 0.0
    %281 = vmatpush1.msra.mxu0 0.0
    %282 = vmatprep.subr.mxu0 0.0
    %283 = vmatpush1.msra.mxu0 0.0
    %284 = vmatprep.subr.mxu0 0.0
    %285 = vmatpush1.msra.mxu0 0.0
    %286 = vmatprep.subr.mxu0 0.0
    %287 = vmatpush1.msra.mxu0 0.0
    %288 = vmatprep.subr.mxu0 0.0
    %289 = vmatpush1.msra.mxu0 0.0
    %290 = vmatprep.subr.mxu0 0.0
    %291 = vmatpush1.msra.mxu0 0.0
    %292 = vmatprep.subr.mxu0 0.0
    %293 = vmatpush1.msra.mxu0 0.0
    %294 = vmatprep.subr.mxu0 0.0
    %295 = vmatpush1.msra.mxu0 0.0
    %296 = vmatprep.subr.mxu0 0.0
    %297 = vmatpush1.msra.mxu0 0.0
    %298 = vmatprep.subr.mxu0 0.0
    %299 = vmatpush1.msra.mxu0 0.0
    %300 = vmatprep.subr.mxu0 0.0
    %301 = vmatpush1.msra.mxu0 0.0
    %302 = vmatprep.subr.mxu0 0.0
    %303 = vmatpush1.msra.mxu0 0.0
    %304 = vmatprep.subr.mxu0 0.0
    %305 = vmatpush1.msra.mxu0 0.0
    %306 = vmatprep.subr.mxu0 0.0
    %307 = vmatpush1.msra.mxu0 0.0
    %308 = vmatprep.subr.mxu0 0.0
    %309 = vmatpush1.msra.mxu0 0.0
    %310 = vmatprep.subr.mxu0 0.0
    %311 = vmatpush1.msra.mxu0 0.0
    %312 = vmatprep.subr.mxu0 0.0
    %313 = vmatpush1.msra.mxu0 0.0
    %314 = vmatprep.subr.mxu0 0.0
    %315 = vmatpush1.msra.mxu0 0.0
    %316 = vmatprep.subr.mxu0 0.0
    %317 = vmatpush1.msra.mxu0 0.0
    %318 = vmatprep.subr.mxu0 0.0
    %319 = vmatpush1.msra.mxu0 0.0
    %320 = vmatprep.mubr.f32.mxu0 0.0
    %321 = vmatmul.mubr.f32.gmra.mrb[0].mxu0 %v254
    %v322 = vpop.f32.mrb[0].mxu0
    %v323 = vadd.f32 %v250, %v322
    %v324 = vpop.f32.mrb[0].mxu0
    %v325 = vadd.f32 %v250, %v324
    %326 = vdwg.mxu0
    %327 = vst [vmem:[#allocation8] sm:$0xff] %v323
    %328 = vst [vmem:[#allocation8 + $0x8] sm:$0xff] %v325
    %s329 = scalar_lea.vmem [#allocation3], 16
    %v330 = vld [vmem:[%s329] sm:$0xff]
    %v331 = vld [vmem:[%s329 + $0x8] sm:$0xff]
    %334 = vrot.lane.b32.xlu0 %v330, 17
    %v335 = vpop.permute.xlu0 %334
    %336 = vrot.lane.b32.xlu0 %v331, 17
    %v337 = vpop.permute.xlu0 %336
    %v338 = vsel %vm52, %v335, %v337
    %v341 = vsel %vm52, 0.0, %v335
    %v342 = vld [vmem:[%s1] sm:$0x3]
    %v344 = vlaneseq
    %v345 = vshrl.u32 %v344, 7
    %v346 = vsub.s32 0, %v345
    %v347 = vrot.slane %v342, %v346
    %v348 = vlaneseq
    %v349 = vshrl.u32 %v348, 7
    %v350 = vsub.s32 1, %v349
    %v351 = vrot.slane %v342, %v350
    %v354 = vmul.f32 %v341, %v347
    %v355 = vmul.f32 %v338, %v351
    %s356 = scalar_lea.vmem [#allocation2], 144
    %357 = vst [vmem:[%s356] sm:$0xff] %v354
    %358 = vst [vmem:[%s356 + $0x8] sm:$0xff] %v355
    %359 = vrot.lane.b32.xlu0 %v330, 16
    %v360 = vpop.permute.xlu0 %359
    %361 = vrot.lane.b32.xlu0 %v331, 16
    %v362 = vpop.permute.xlu0 %361
    %v363 = vsel %vm77, %v360, %v362
    %v366 = vsel %vm77, 0.0, %v360
    %367 = vst [vmem:[%s356 + $0x10] sm:$0xff] %v366
    %368 = vst [vmem:[%s356 + $0x18] sm:$0xff] %v363
    %369 = vrot.lane.b32.xlu0 %v330, 15
    %v370 = vpop.permute.xlu0 %369
    %371 = vrot.lane.b32.xlu0 %v331, 15
    %v372 = vpop.permute.xlu0 %371
    %v373 = vsel %vm88, %v370, %v372
    %v376 = vsel %vm88, 0.0, %v370
    %v377 = vld [vmem:[%s93] sm:$0x3]
    %v379 = vlaneseq
    %v380 = vshrl.u32 %v379, 7
    %v381 = vsub.s32 0, %v380
    %v382 = vrot.slane %v377, %v381
    %v383 = vlaneseq
    %v384 = vshrl.u32 %v383, 7
    %v385 = vsub.s32 1, %v384
    %v386 = vrot.slane %v377, %v385
    %v389 = vmul.f32 %v376, %v382
    %v390 = vmul.f32 %v373, %v386
    %391 = vst [vmem:[%s356 + $0x20] sm:$0xff] %v389
    %392 = vst [vmem:[%s356 + $0x28] sm:$0xff] %v390
    %393 = vrot.lane.b32.xlu0 %v330, 1
    %v394 = vpop.permute.xlu0 %393
    %395 = vrot.lane.b32.xlu0 %v331, 1
    %v396 = vpop.permute.xlu0 %395
    %v397 = vsel %vm114, %v394, %v396
    %v400 = vsel %vm114, 0.0, %v394
    %v401 = vld [vmem:[%s119] sm:$0x3]
    %v403 = vlaneseq
    %v404 = vshrl.u32 %v403, 7
    %v405 = vsub.s32 0, %v404
    %v406 = vrot.slane %v401, %v405
    %v407 = vlaneseq
    %v408 = vshrl.u32 %v407, 7
    %v409 = vsub.s32 1, %v408
    %v410 = vrot.slane %v401, %v409
    %v413 = vmul.f32 %v400, %v406
    %v414 = vmul.f32 %v397, %v410
    %415 = vst [vmem:[%s356 + $0x30] sm:$0xff] %v413
    %416 = vst [vmem:[%s356 + $0x38] sm:$0xff] %v414
    %417 = vst [vmem:[%s356 + $0x40] sm:$0xff] %v330
    %418 = vst [vmem:[%s356 + $0x48] sm:$0xff] %v331
    %419 = vrot.lane.b32.xlu0 %v330, 127
    %v420 = vpop.permute.xlu0 %419
    %421 = vrot.lane.b32.xlu0 %v331, 127
    %v422 = vpop.permute.xlu0 %421
    %v423 = vsel %vm142, %v420, %v422
    %v426 = vsel %vm142, %v422, 0.0
    %v427 = vld [vmem:[%s147] sm:$0x3]
    %v429 = vlaneseq
    %v430 = vshrl.u32 %v429, 7
    %v431 = vsub.s32 0, %v430
    %v432 = vrot.slane %v427, %v431
    %v433 = vlaneseq
    %v434 = vshrl.u32 %v433, 7
    %v435 = vsub.s32 1, %v434
    %v436 = vrot.slane %v427, %v435
    %v439 = vmul.f32 %v423, %v432
    %v440 = vmul.f32 %v426, %v436
    %441 = vst [vmem:[%s356 + $0x50] sm:$0xff] %v439
    %442 = vst [vmem:[%s356 + $0x58] sm:$0xff] %v440
    %443 = vrot.lane.b32.xlu0 %v330, 113
    %v444 = vpop.permute.xlu0 %443
    %445 = vrot.lane.b32.xlu0 %v331, 113
    %v446 = vpop.permute.xlu0 %445
    %v447 = vsel %vm168, %v444, %v446
    %v450 = vsel %vm168, %v446, 0.0
    %v451 = vld [vmem:[%s173] sm:$0x3]
    %v453 = vlaneseq
    %v454 = vshrl.u32 %v453, 7
    %v455 = vsub.s32 0, %v454
    %v456 = vrot.slane %v451, %v455
    %v457 = vlaneseq
    %v458 = vshrl.u32 %v457, 7
    %v459 = vsub.s32 1, %v458
    %v460 = vrot.slane %v451, %v459
    %v463 = vmul.f32 %v447, %v456
    %v464 = vmul.f32 %v450, %v460
    %465 = vst [vmem:[%s356 + $0x60] sm:$0xff] %v463
    %466 = vst [vmem:[%s356 + $0x68] sm:$0xff] %v464
    %467 = vrot.lane.b32.xlu0 %v330, 112
    %v468 = vpop.permute.xlu0 %467
    %469 = vrot.lane.b32.xlu0 %v331, 112
    %v470 = vpop.permute.xlu0 %469
    %v471 = vsel %vm194, %v468, %v470
    %v474 = vsel %vm194, %v470, 0.0
    %475 = vst [vmem:[%s356 + $0x70] sm:$0xff] %v471
    %476 = vst [vmem:[%s356 + $0x78] sm:$0xff] %v474
    %477 = vrot.lane.b32.xlu0 %v330, 111
    %v478 = vpop.permute.xlu0 %477
    %479 = vrot.lane.b32.xlu0 %v331, 111
    %v480 = vpop.permute.xlu0 %479
    %v481 = vsel %vm205, %v478, %v480
    %v484 = vsel %vm205, %v480, 0.0
    %v485 = vld [vmem:[%s210] sm:$0x3]
    %v487 = vlaneseq
    %v488 = vshrl.u32 %v487, 7
    %v489 = vsub.s32 0, %v488
    %v490 = vrot.slane %v485, %v489
    %v491 = vlaneseq
    %v492 = vshrl.u32 %v491, 7
    %v493 = vsub.s32 1, %v492
    %v494 = vrot.slane %v485, %v493
    %v497 = vmul.f32 %v481, %v490
    %v498 = vmul.f32 %v484, %v494
    %499 = vst [vmem:[%s356 + $0x80] sm:$0xff] %v497
    %500 = vst [vmem:[%s356 + $0x88] sm:$0xff] %v498
    %v501 = vld [vmem:[#allocation6] sm:$0xff]
    %v502 = vld [vmem:[%s356] sm:$0xff]
    %v503 = vld [vmem:[%s356 + $0x8] sm:$0xff]
    %v504 = vld [vmem:[%s356 + $0x10] sm:$0xff]
    %v505 = vld [vmem:[%s356 + $0x18] sm:$0xff]
    %v506 = vld [vmem:[%s356 + $0x20] sm:$0xff]
    %v507 = vld [vmem:[%s356 + $0x28] sm:$0xff]
    %v508 = vld [vmem:[%s356 + $0x30] sm:$0xff]
    %v509 = vld [vmem:[%s356 + $0x38] sm:$0xff]
    %v510 = vld [vmem:[%s356 + $0x40] sm:$0xff]
    %v511 = vld [vmem:[%s356 + $0x48] sm:$0xff]
    %v512 = vld [vmem:[%s356 + $0x50] sm:$0xff]
    %v513 = vld [vmem:[%s356 + $0x58] sm:$0xff]
    %v514 = vld [vmem:[%s356 + $0x60] sm:$0xff]
    %v515 = vld [vmem:[%s356 + $0x68] sm:$0xff]
    %v516 = vld [vmem:[%s356 + $0x70] sm:$0xff]
    %v517 = vld [vmem:[%s356 + $0x78] sm:$0xff]
    %v518 = vld [vmem:[%s356 + $0x80] sm:$0xff]
    %v519 = vld [vmem:[%s356 + $0x88] sm:$0xff]
    %v520 = vld [vmem:[%s3] sm:$0xff]
    %522 = vset.pattern.permute.xlu0 0
    %523 = vperm.xlu0 %522, %v520
    %v524 = vpop.permute.xlu0 %523
    %v527 = vsel %vm252, %v501, 0
    %529 = vmatprep.subr.mxu0 %v503
    %530 = vmatpush1.msra.mxu0 %v502
    %531 = vmatprep.subr.mxu0 %v505
    %532 = vmatpush1.msra.mxu0 %v504
    %533 = vmatprep.subr.mxu0 %v507
    %534 = vmatpush1.msra.mxu0 %v506
    %535 = vmatprep.subr.mxu0 %v509
    %536 = vmatpush1.msra.mxu0 %v508
    %537 = vmatprep.subr.mxu0 %v511
    %538 = vmatpush1.msra.mxu0 %v510
    %539 = vmatprep.subr.mxu0 %v513
    %540 = vmatpush1.msra.mxu0 %v512
    %541 = vmatprep.subr.mxu0 %v515
    %542 = vmatpush1.msra.mxu0 %v514
    %543 = vmatprep.subr.mxu0 %v517
    %544 = vmatpush1.msra.mxu0 %v516
    %545 = vmatprep.subr.mxu0 %v519
    %546 = vmatpush1.msra.mxu0 %v518
    %547 = vmatprep.subr.mxu0 0.0
    %548 = vmatpush1.msra.mxu0 0.0
    %549 = vmatprep.subr.mxu0 0.0
    %550 = vmatpush1.msra.mxu0 0.0
    %551 = vmatprep.subr.mxu0 0.0
    %552 = vmatpush1.msra.mxu0 0.0
    %553 = vmatprep.subr.mxu0 0.0
    %554 = vmatpush1.msra.mxu0 0.0
    %555 = vmatprep.subr.mxu0 0.0
    %556 = vmatpush1.msra.mxu0 0.0
    %557 = vmatprep.subr.mxu0 0.0
    %558 = vmatpush1.msra.mxu0 0.0
    %559 = vmatprep.subr.mxu0 0.0
    %560 = vmatpush1.msra.mxu0 0.0
    %561 = vmatprep.subr.mxu0 0.0
    %562 = vmatpush1.msra.mxu0 0.0
    %563 = vmatprep.subr.mxu0 0.0
    %564 = vmatpush1.msra.mxu0 0.0
    %565 = vmatprep.subr.mxu0 0.0
    %566 = vmatpush1.msra.mxu0 0.0
    %567 = vmatprep.subr.mxu0 0.0
    %568 = vmatpush1.msra.mxu0 0.0
    %569 = vmatprep.subr.mxu0 0.0
    %570 = vmatpush1.msra.mxu0 0.0
    %571 = vmatprep.subr.mxu0 0.0
    %572 = vmatpush1.msra.mxu0 0.0
    %573 = vmatprep.subr.mxu0 0.0
    %574 = vmatpush1.msra.mxu0 0.0
    %575 = vmatprep.subr.mxu0 0.0
    %576 = vmatpush1.msra.mxu0 0.0
    %577 = vmatprep.subr.mxu0 0.0
    %578 = vmatpush1.msra.mxu0 0.0
    %579 = vmatprep.subr.mxu0 0.0
    %580 = vmatpush1.msra.mxu0 0.0
    %581 = vmatprep.subr.mxu0 0.0
    %582 = vmatpush1.msra.mxu0 0.0
    %583 = vmatprep.subr.mxu0 0.0
    %584 = vmatpush1.msra.mxu0 0.0
    %585 = vmatprep.subr.mxu0 0.0
    %586 = vmatpush1.msra.mxu0 0.0
    %587 = vmatprep.subr.mxu0 0.0
    %588 = vmatpush1.msra.mxu0 0.0
    %589 = vmatprep.subr.mxu0 0.0
    %590 = vmatpush1.msra.mxu0 0.0
    %591 = vmatprep.subr.mxu0 0.0
    %592 = vmatpush1.msra.mxu0 0.0
    %593 = vmatprep.mubr.f32.mxu0 0.0
    %594 = vmatmul.mubr.f32.gmra.mrb[0].mxu0 %v527
    %v595 = vpop.f32.mrb[0].mxu0
    %v596 = vadd.f32 %v524, %v595
    %v597 = vpop.f32.mrb[0].mxu0
    %v598 = vadd.f32 %v524, %v597
    %599 = vdwg.mxu0
    %s600 = scalar_lea.vmem [#allocation8], 16
    %601 = vst [vmem:[%s600] sm:$0xff] %v596
    %602 = vst [vmem:[%s600 + $0x8] sm:$0xff] %v598
    // Predicated region
    $region26: #{tpu_custom_call.1} parent=1 // pred_check
      _
    $region27: #{tpu_custom_call.1} parent=1 // pred_check_branch
      %604 = sbr.rel (0) target = $region29
    $region28: #{tpu_custom_call.1} parent=1 // pred_region
      %s606 = ssub.s32 512, 512
      %607 = vsyncadd [#allocation5], %s606
      %s608 = sshll.u32 [#allocation8], 4
      %s609 = int_to_ptr.vmem [resolvable:$true] %s608
      %614 = dma.vmem_to_hbm [thread:$0]  %s609, 512, %s4, [#allocation5], 256, 256, 16
    $region29: #{tpu_custom_call.1} parent=1 // pred_fallthru
      _
    // Predicated region
    $region30: #{tpu_custom_call.1} parent=1 // pred_check
      _
    $region31: #{tpu_custom_call.1} parent=1 // pred_check_branch
      %616 = sbr.rel (0) target = $region33
    $region32: #{tpu_custom_call.1} parent=1 // pred_region
      %617 = dma.done [#allocation5], 512
    $region33: #{tpu_custom_call.1} parent=1 // pred_fallthru
      _
    %618 = vsyncpa [#allocation4], 1
    %619 = vsyncpa [#allocation7], 1
    %620 = vsyncpa [#allocation5], 1

</llo_original>
